<compile_context>
chip_gen: v7x
topology: tpu7x:2x2x1
jax: 0.10.0
libtpu: 0.0.40
codegen_flags: <defaults>
</compile_context>

<pallas_src>
import functools

import jax
import jax.numpy as jnp
import numpy as np
from jax.experimental import pallas as pl
from jax.experimental.pallas import tpu as pltpu


# ----------------------------- Pallas kernel --------------------------------
def _pse_loss_kernel(thr_ref, pred_ref, label_ref, mask_ref, out_ref,
                     num_acc, den_acc, *, Lambda, n, P, CH, has_tail):
    """Per (sample, pixel-chunk) partial dice sums; finalize on the last chunk.

    pred_ref  : (n, CH) native-dtype VMEM (upcast to f32 after load)
    label_ref : (n, CH) VMEM (binary maps; int8 or float)
    mask_ref  : (1, CH) VMEM (binary mask; int8 or float)
    thr_ref   : (bs,)   f32 SMEM (OHEM threshold; -inf => keep every pixel)
    out_ref   : (1, 128) f32 VMEM, lanes: 0 = L_c, 1 = L_s, 2 = loss
    num_acc / den_acc : (n, 1) f32 VMEM scratch (per-row dice partial sums)
    """
    b = pl.program_id(0)
    c = pl.program_id(1)

    @pl.when(c == 0)
    def _():
        num_acc[...] = jnp.zeros_like(num_acc)
        den_acc[...] = jnp.zeros_like(den_acc)

    pred = pred_ref[...].astype(jnp.float32)                 # (n, CH)
    label = label_ref[...].astype(jnp.float32)               # (n, CH)
    mask = mask_ref[...].astype(jnp.float32)                 # (1, CH)

    if has_tail:
        # Ragged last chunk: zero the lanes past P (NaN-safe via where, since the
        # out-of-bounds VMEM region is undefined).
        lane = jax.lax.broadcasted_iota(jnp.int32, (1, CH), 1)
        valid = (c * CH + lane) < P                          # (1, CH)
        pred = jnp.where(valid, pred, 0.0)
        label = jnp.where(valid, label, 0.0)
        mask = jnp.where(valid, mask, 0.0)

    pred_n = pred[n - 1:n, :] * mask                         # (1, CH)
    # OHEM gate for the full-text row: mask * M with M = (pred_n >= thr).
    # (mask and M are 0/1, so mask*M folds both multiplies of the dice terms.)
    gate_c = mask * (pred_n >= thr_ref[b]).astype(jnp.float32)
    # Gate for the shrunk-kernel rows: W = (pred_n >= 0.5).
    W = (pred_n >= 0.5).astype(jnp.float32)

    if n > 1:
        # (n, 1) iota + broadcast select (cheap) instead of an (n, CH) iota.
        row = jax.lax.broadcasted_iota(jnp.int32, (n, 1), 0)
        gates = jnp.where(row == n - 1, gate_c, W)           # (n, CH)
    else:
        gates = gate_c                                       # (1, CH)

    # Per-row dice partial sums, all rows at once (full sublane occupancy).
    # labels are binary maps, so label*label == label (one fewer VPU mul/elem).
    num_acc[...] += jnp.sum(pred * label * gates, axis=-1, keepdims=True)
    den_acc[...] += jnp.sum((pred * pred + label) * gates, axis=-1, keepdims=True)

    @pl.when(c == pl.num_programs(1) - 1)
    def _():
        dice = 2.0 * num_acc[...] / (den_acc[...] + 1e-6)    # (n, 1)
        L_c = 1.0 - dice[n - 1:n, :]                         # (1, 1)
        if n > 1:
            L_s = 1.0 - jnp.sum(dice[0:n - 1, :], axis=0,
                                keepdims=True) / float(n - 1)
        else:
            # torch cal_D returns 1 when there are no kernel maps -> L_s = 0
            L_s = jnp.zeros_like(L_c)
        loss = Lambda * L_c + (1.0 - Lambda) * L_s
        lane_o = jax.lax.broadcasted_iota(jnp.int32, (1, 128), 1)
        out_ref[...] = jnp.where(lane_o == 0, L_c,
                                 jnp.where(lane_o == 1, L_s, loss))


# ----------------------------- wrapper helpers -------------------------------
def _as_binary_map(x):
    """bool/int binary maps -> int8 (4x fewer HBM bytes); floats stream as-is
    (avoids an extra wrapper-side read+write cast pass)."""
    if jnp.issubdtype(x.dtype, jnp.floating):
        return x
    return x.astype(jnp.int8)


def _pick_chunk(P, per_lane_bytes, budget_bytes=28 << 20, max_chunk=256 * 1024):
    """Lane-dense chunk size: as large as fits the double-buffered VMEM budget.

    Returns (CH, n_chunks, has_tail).  CH is a multiple of 128 unless it equals
    the full pixel count P (single chunk), so the (8,128) tiling rule holds for
    any resolution.  28 MiB input budget + 48 MiB scoped limit is safe on
    v5e/v6e (128 MiB physical) and v7x (64 MiB per TC).
    """
    max_chunk = max(128, (max_chunk // 128) * 128)
    ch = (budget_bytes // max(per_lane_bytes, 1)) // 128 * 128
    ch = max(128, min(ch, max_chunk))
    if ch >= P:
        return P, 1, False
    n_chunks = -(-P // ch)
    return ch, n_chunks, (P % ch != 0)


def _kth_largest_negative(pred_last, k):
    """Exact per-sample k-th largest value among entries < 0.5 -- no sort.

    Bitwise radix-select on the order-preserving uint32 key of f32 values:
    32 compare+count reductions, O(32*P) total (vs O(P log P) for jnp.sort).
    Matches torch.topk(...)[k-1] bit-exactly.
    """
    bits = jax.lax.bitcast_convert_type(pred_last, jnp.uint32)        # (bs, P)
    sign = bits >> jnp.uint32(31)
    key = jnp.where(sign == jnp.uint32(1), ~bits,
                    bits | jnp.uint32(0x80000000))                    # monotone
    is_neg = pred_last < 0.5

    def body(i, prefix):
        bit = jnp.uint32(0x80000000) >> i.astype(jnp.uint32)
        cand = prefix | bit                                           # (bs,)
        cnt = jnp.sum(((key >= cand[:, None]) & is_neg).astype(jnp.int32),
                      axis=-1)
        return jnp.where(cnt >= k, cand, prefix)

    kth_key = jax.lax.fori_loop(0, 32, body,
                                jnp.zeros((pred_last.shape[0],), jnp.uint32))
    was_neg = (kth_key >> jnp.uint32(31)) == jnp.uint32(0)
    kth_bits = jnp.where(was_neg, ~kth_key, kth_key & jnp.uint32(0x7FFFFFFF))
    return jax.lax.bitcast_convert_type(kth_bits, jnp.float32)


# --------------------------------- wrapper -----------------------------------
def pse_loss(preds, labels, training_mask, Lambda=0.7, ratio=3,
             reduction="mean", max_chunk=256 * 1024):
    assert reduction in ("mean", "sum")
    bs, n, w, h = preds.shape
    P = w * h

    preds_r = preds.reshape(bs, n, P)                        # native dtype
    labels_r = _as_binary_map(labels.reshape(bs, n, P))
    mask_r = _as_binary_map(training_mask.reshape(bs, 1, P))

    # ---- OHEM threshold glue (plain JAX, no sort) ---------------------------
    # thr = k-th largest "negative" (< 0.5) score of pred_n, or -inf when the
    # OHEM branch is inactive (pred_n >= -inf keeps every pixel, i.e. torch's
    # M = ones_like branch) -- no separate flag / select in the kernel.
    pred_last = (preds_r[:, -1, :].astype(jnp.float32)
                 * training_mask.reshape(bs, P).astype(jnp.float32))   # (bs, P)
    n_pos = jnp.sum(pred_last >= 0.5, axis=-1).astype(jnp.int32)
    n_neg = jnp.int32(P) - n_pos
    k = n_pos * jnp.int32(ratio)
    use_thr = (n_neg > k) & (k > 0)
    kth = _kth_largest_negative(pred_last, k)
    thr = jnp.where(use_thr, kth, -jnp.inf).astype(jnp.float32)
    # --------------------------------------------------------------------------

    per_lane = 2 * (n * preds_r.dtype.itemsize
                    + n * labels_r.dtype.itemsize
                    + mask_r.dtype.itemsize)                 # double-buffered
    CH, n_chunks, has_tail = _pick_chunk(P, per_lane, max_chunk=max_chunk)

    kernel = functools.partial(_pse_loss_kernel, Lambda=float(Lambda), n=n,
                               P=P, CH=CH, has_tail=has_tail)

    out = pl.pallas_call(
        kernel,
        out_shape=jax.ShapeDtypeStruct((bs, 1, 128), jnp.float32),
        grid=(bs, n_chunks),
        in_specs=[
            pl.BlockSpec(memory_space=pltpu.MemorySpace.SMEM),       # thr (bs,)
            pl.BlockSpec((None, n, CH), lambda b, c: (b, 0, c)),     # preds
            pl.BlockSpec((None, n, CH), lambda b, c: (b, 0, c)),     # labels
            pl.BlockSpec((None, 1, CH), lambda b, c: (b, 0, c)),     # mask
        ],
        out_specs=pl.BlockSpec((None, 1, 128), lambda b, c: (b, 0, 0)),
        scratch_shapes=[pltpu.VMEM((n, 1), jnp.float32),             # num_acc
                        pltpu.VMEM((n, 1), jnp.float32)],            # den_acc
        compiler_params=pltpu.CompilerParams(
            dimension_semantics=("parallel", "arbitrary"),
            vmem_limit_bytes=48 * 1024 * 1024),
    )(thr, preds_r, labels_r, mask_r)

    L_c = out[:, 0, 0]
    L_s = out[:, 0, 1]
    all_loss = out[:, 0, 2]
    if reduction == "mean":
        return L_c.mean(), L_s.mean(), all_loss.mean()
    return L_c.sum(), L_s.sum(), all_loss.sum()


# ----------------------------- pure-JAX reference ----------------------------
def pse_loss_ref(preds, labels, training_mask, Lambda, ratio, reduction):
    bs, n, w, h = preds.shape
    P = w * h
    preds = preds.reshape(bs, n, P).astype(jnp.float32)
    labels = labels.reshape(bs, n, P).astype(jnp.float32)
    mask = training_mask.reshape(bs, P).astype(jnp.float32)

    def dice(s, g):
        return 2.0 * jnp.sum(s * g) / (jnp.sum(s * s) + jnp.sum(g * g) + 1e-6)

    Lcs, Lss, Lall = [], [], []
    for b in range(bs):
        pred, label, m = preds[b], labels[b], mask[b]
        pred_n = pred[-1] * m
        label_n = label[-1] * m
        n_pos = int(jnp.sum(pred_n >= 0.5))
        n_neg = int(jnp.sum(pred_n < 0.5))
        if n_neg > n_pos * ratio:
            kk = n_pos * ratio
            if kk > 0:
                neg = pred_n[pred_n < 0.5]
                vals = jnp.sort(neg)[::-1][:kk]
                M = (pred_n >= vals[-1]).astype(jnp.float32)
            else:
                M = jnp.ones_like(pred_n)
        else:
            M = jnp.ones_like(pred_n)
        L_c = 1.0 - dice(pred_n * M, label_n * M)
        W = (pred_n >= 0.5).astype(jnp.float32)
        ds = [dice(pred[i] * W, label[i] * W) for i in range(n - 1)]
        L_s = 1.0 - (sum(ds) / len(ds) if ds else jnp.float32(1.0))
        Lcs.append(L_c)
        Lss.append(L_s)
        Lall.append(Lambda * L_c + (1.0 - Lambda) * L_s)
    Lcs, Lss, Lall = jnp.stack(Lcs), jnp.stack(Lss), jnp.stack(Lall)
    if reduction == "mean":
        return Lcs.mean(), Lss.mean(), Lall.mean()
    return Lcs.sum(), Lss.sum(), Lall.sum()


if __name__ == "__main__":
    key = jax.random.PRNGKey(0)
    k1, k2, k3 = jax.random.split(key, 3)
    bs, n, w, h = 2, 4, 32, 32

    # skew preds low so the OHEM (n_neg > ratio * n_pos) branch is exercised
    preds = jax.random.uniform(k1, (bs, n, w, h), dtype=jnp.float32) ** 4
    labels = (jax.random.uniform(k2, (bs, n, w, h)) > 0.7).astype(jnp.float32)
    training_mask = (jax.random.uniform(k3, (bs, w, h)) > 0.1).astype(jnp.float32)

    rL_c, rL_s, rloss = pse_loss_ref(preds, labels, training_mask, 0.7, 3, "mean")

    def check(res):
        L_c, L_s, loss = res
        jax.block_until_ready((L_c, L_s, loss))
        np.testing.assert_allclose(np.array(L_c), np.array(rL_c), rtol=1e-3, atol=1e-3)
        np.testing.assert_allclose(np.array(L_s), np.array(rL_s), rtol=1e-3, atol=1e-3)
        np.testing.assert_allclose(np.array(loss), np.array(rloss), rtol=1e-3, atol=1e-3)

    # 1) default: single large lane-dense chunk per sample
    check(pse_loss(preds, labels, training_mask, Lambda=0.7, ratio=3,
                   reduction="mean"))

    # 2) forced small chunks with a ragged tail (exercises cdiv grid + lane mask)
    check(pse_loss(preds, labels, training_mask, Lambda=0.7, ratio=3,
                   reduction="mean", max_chunk=384))

    # 3) bf16 preds streamed in native dtype (kernel upcasts after the VMEM load)
    preds_bf16 = preds.astype(jnp.bfloat16)
    rL_c, rL_s, rloss = pse_loss_ref(preds_bf16, labels, training_mask, 0.7, 3, "mean")
    check(pse_loss(preds_bf16, labels, training_mask, Lambda=0.7, ratio=3,
                   reduction="mean"))

    print("KERNEL_OK")
</pallas_src>

<mosaic_0001>
module attributes {stable_mosaic.version = 11 : i64} {
  func.func @_pse_loss_kernel(%arg0: i32, %arg1: i32, %arg2: memref<2xf32, #tpu.memory_space<smem>>, %arg3: memref<1x4x1024xf32, #tpu.memory_space<vmem>>, %arg4: memref<1x4x1024xf32, #tpu.memory_space<vmem>>, %arg5: memref<1x1x1024xf32, #tpu.memory_space<vmem>>, %arg6: memref<1x1x128xf32, #tpu.memory_space<vmem>>, %arg7: memref<4x1xf32, #tpu.memory_space<vmem>>, %arg8: memref<4x1xf32, #tpu.memory_space<vmem>>) attributes {dimension_semantics = [#tpu.dimension_semantics<parallel>, #tpu.dimension_semantics<arbitrary>], iteration_bounds = array<i64: 2, 1>, scalar_prefetch = 0 : i64, scratch_operands = 2 : i64, tpu.core_type = #tpu.core_type<tc>, window_params = [{transform_indices = @transform_0, window_bounds = array<i64: 2>}, {transform_indices = @transform_1, window_bounds = array<i64: 1, 4, 1024>}, {transform_indices = @transform_2, window_bounds = array<i64: 1, 4, 1024>}, {transform_indices = @transform_3, window_bounds = array<i64: 1, 1, 1024>}, {transform_indices = @transform_4, window_bounds = array<i64: 1, 1, 128>}]} {
    %c0_i32 = arith.constant 0 : i32
    %0 = arith.cmpi eq, %arg1, %c0_i32 : i32
    %1 = arith.extui %0 : i1 to i32
    %c0_i32_0 = arith.constant 0 : i32
    %2 = arith.cmpi ne, %1, %c0_i32_0 : i32
    scf.if %2 {
      %cst_21 = arith.constant 0.000000e+00 : f32
      %50 = vector.broadcast %cst_21 : f32 to vector<4x1xf32>
      %c0_22 = arith.constant 0 : index
      %c0_23 = arith.constant 0 : index
      %51 = vector.load %arg7[%c0_22, %c0_23] : memref<4x1xf32, #tpu.memory_space<vmem>>, vector<4x1xf32>
      tpu.vector_store %arg7[%c0_22, %c0_23], %50 {strides = array<i32>} : memref<4x1xf32, #tpu.memory_space<vmem>>, vector<4x1xf32>,
      %cst_24 = arith.constant 0.000000e+00 : f32
      %52 = vector.broadcast %cst_24 : f32 to vector<4x1xf32>
      %c0_25 = arith.constant 0 : index
      %c0_26 = arith.constant 0 : index
      %53 = vector.load %arg8[%c0_25, %c0_26] : memref<4x1xf32, #tpu.memory_space<vmem>>, vector<4x1xf32>
      tpu.vector_store %arg8[%c0_25, %c0_26], %52 {strides = array<i32>} : memref<4x1xf32, #tpu.memory_space<vmem>>, vector<4x1xf32>,
    } else {
    }
    %c0 = arith.constant 0 : index
    %c0_1 = arith.constant 0 : index
    %c0_2 = arith.constant 0 : index
    %3 = vector.load %arg3[%c0, %c0_1, %c0_2] : memref<1x4x1024xf32, #tpu.memory_space<vmem>>, vector<1x4x1024xf32>
    %4 = vector.shape_cast %3 : vector<1x4x1024xf32> to vector<4x1024xf32>
    %c0_3 = arith.constant 0 : index
    %c0_4 = arith.constant 0 : index
    %c0_5 = arith.constant 0 : index
    %5 = vector.load %arg4[%c0_3, %c0_4, %c0_5] : memref<1x4x1024xf32, #tpu.memory_space<vmem>>, vector<1x4x1024xf32>
    %6 = vector.shape_cast %5 : vector<1x4x1024xf32> to vector<4x1024xf32>
    %c0_6 = arith.constant 0 : index
    %c0_7 = arith.constant 0 : index
    %c0_8 = arith.constant 0 : index
    %7 = vector.load %arg5[%c0_6, %c0_7, %c0_8] : memref<1x1x1024xf32, #tpu.memory_space<vmem>>, vector<1x1x1024xf32>
    %8 = vector.shape_cast %7 : vector<1x1x1024xf32> to vector<1x1024xf32>
    %9 = vector.extract_strided_slice %4 {offsets = [3, 0], sizes = [1, 1024], strides = [1, 1]} : vector<4x1024xf32> to vector<1x1024xf32>
    %10 = arith.mulf %9, %8 : vector<1x1024xf32>
    %11 = arith.index_cast %arg0 : i32 to index
    %12 = memref.load %arg2[%11] : memref<2xf32, #tpu.memory_space<smem>>
    %13 = vector.broadcast %12 : f32 to vector<1x1024xf32>
    %14 = arith.cmpf oge, %10, %13 : vector<1x1024xf32>
    %15 = arith.extui %14 : vector<1x1024xi1> to vector<1x1024xi32>
    %16 = arith.sitofp %15 : vector<1x1024xi32> to vector<1x1024xf32>
    %17 = arith.mulf %8, %16 : vector<1x1024xf32>
    %cst = arith.constant 5.000000e-01 : f32
    %18 = vector.broadcast %cst : f32 to vector<1x1024xf32>
    %19 = arith.cmpf oge, %10, %18 : vector<1x1024xf32>
    %20 = arith.extui %19 : vector<1x1024xi1> to vector<1x1024xi32>
    %21 = arith.sitofp %20 : vector<1x1024xi32> to vector<1x1024xf32>
    %22 = tpu.iota {dimensions = array<i32: 0>} : vector<4x1xi32>
    %c3_i32 = arith.constant 3 : i32
    %23 = vector.broadcast %c3_i32 : i32 to vector<4x1xi32>
    %24 = arith.cmpi eq, %22, %23 : vector<4x1xi32>
    %25 = vector.shape_cast %24 : vector<4x1xi1> to vector<4x1xi1>
    %26 = vector.broadcast %25 : vector<4x1xi1> to vector<4x1024xi1>
    %27 = vector.shape_cast %17 : vector<1x1024xf32> to vector<1x1024xf32>
    %28 = vector.broadcast %27 : vector<1x1024xf32> to vector<4x1024xf32>
    %29 = vector.shape_cast %21 : vector<1x1024xf32> to vector<1x1024xf32>
    %30 = vector.broadcast %29 : vector<1x1024xf32> to vector<4x1024xf32>
    %31 = arith.select %26, %28, %30 : vector<4x1024xi1>, vector<4x1024xf32>
    %c0_9 = arith.constant 0 : index
    %c0_10 = arith.constant 0 : index
    %32 = vector.load %arg7[%c0_9, %c0_10] : memref<4x1xf32, #tpu.memory_space<vmem>>, vector<4x1xf32>
    %33 = arith.mulf %4, %6 : vector<4x1024xf32>
    %34 = arith.mulf %33, %31 : vector<4x1024xf32>
    %cst_11 = arith.constant dense<0.000000e+00> : vector<4xf32>
    %35 = vector.multi_reduction <add>, %34, %cst_11 [1] : vector<4x1024xf32> to vector<4xf32>
    %36 = vector.shape_cast %35 : vector<4xf32> to vector<4x1xf32>
    %37 = arith.addf %32, %36 : vector<4x1xf32>
    %c0_12 = arith.constant 0 : index
    %c0_13 = arith.constant 0 : index
    %38 = vector.load %arg7[%c0_12, %c0_13] : memref<4x1xf32, #tpu.memory_space<vmem>>, vector<4x1xf32>
    tpu.vector_store %arg7[%c0_12, %c0_13], %37 {strides = array<i32>} : memref<4x1xf32, #tpu.memory_space<vmem>>, vector<4x1xf32>,
    %c0_14 = arith.constant 0 : index
    %c0_15 = arith.constant 0 : index
    %39 = vector.load %arg8[%c0_14, %c0_15] : memref<4x1xf32, #tpu.memory_space<vmem>>, vector<4x1xf32>
    %40 = arith.mulf %4, %4 : vector<4x1024xf32>
    %41 = arith.addf %40, %6 : vector<4x1024xf32>
    %42 = arith.mulf %41, %31 : vector<4x1024xf32>
    %cst_16 = arith.constant dense<0.000000e+00> : vector<4xf32>
    %43 = vector.multi_reduction <add>, %42, %cst_16 [1] : vector<4x1024xf32> to vector<4xf32>
    %44 = vector.shape_cast %43 : vector<4xf32> to vector<4x1xf32>
    %45 = arith.addf %39, %44 : vector<4x1xf32>
    %c0_17 = arith.constant 0 : index
    %c0_18 = arith.constant 0 : index
    %46 = vector.load %arg8[%c0_17, %c0_18] : memref<4x1xf32, #tpu.memory_space<vmem>>, vector<4x1xf32>
    tpu.vector_store %arg8[%c0_17, %c0_18], %45 {strides = array<i32>} : memref<4x1xf32, #tpu.memory_space<vmem>>, vector<4x1xf32>,
    %c0_i32_19 = arith.constant 0 : i32
    %47 = arith.cmpi eq, %arg1, %c0_i32_19 : i32
    %48 = arith.extui %47 : i1 to i32
    %c0_i32_20 = arith.constant 0 : i32
    %49 = arith.cmpi ne, %48, %c0_i32_20 : i32
    scf.if %49 {
      %c0_21 = arith.constant 0 : index
      %c0_22 = arith.constant 0 : index
      %50 = vector.load %arg7[%c0_21, %c0_22] : memref<4x1xf32, #tpu.memory_space<vmem>>, vector<4x1xf32>
      %cst_23 = arith.constant 2.000000e+00 : f32
      %51 = vector.broadcast %cst_23 : f32 to vector<4x1xf32>
      %52 = arith.mulf %51, %50 : vector<4x1xf32>
      %c0_24 = arith.constant 0 : index
      %c0_25 = arith.constant 0 : index
      %53 = vector.load %arg8[%c0_24, %c0_25] : memref<4x1xf32, #tpu.memory_space<vmem>>, vector<4x1xf32>
      %cst_26 = arith.constant 9.99999997E-7 : f32
      %54 = vector.broadcast %cst_26 : f32 to vector<4x1xf32>
      %55 = arith.addf %53, %54 : vector<4x1xf32>
      %56 = arith.divf %52, %55 : vector<4x1xf32>
      %57 = vector.extract_strided_slice %56 {offsets = [3, 0], sizes = [1, 1], strides = [1, 1]} : vector<4x1xf32> to vector<1x1xf32>
      %cst_27 = arith.constant 1.000000e+00 : f32
      %58 = vector.broadcast %cst_27 : f32 to vector<1x1xf32>
      %59 = arith.subf %58, %57 : vector<1x1xf32>
      %60 = vector.extract_strided_slice %56 {offsets = [0, 0], sizes = [3, 1], strides = [1, 1]} : vector<4x1xf32> to vector<3x1xf32>
      %cst_28 = arith.constant dense<0.000000e+00> : vector<1xf32>
      %61 = vector.multi_reduction <add>, %60, %cst_28 [0] : vector<3x1xf32> to vector<1xf32>
      %62 = vector.shape_cast %61 : vector<1xf32> to vector<1x1xf32>
      %cst_29 = arith.constant 3.000000e+00 : f32
      %63 = vector.broadcast %cst_29 : f32 to vector<1x1xf32>
      %64 = arith.divf %62, %63 : vector<1x1xf32>
      %cst_30 = arith.constant 1.000000e+00 : f32
      %65 = vector.broadcast %cst_30 : f32 to vector<1x1xf32>
      %66 = arith.subf %65, %64 : vector<1x1xf32>
      %cst_31 = arith.constant 0.699999988 : f32
      %67 = vector.broadcast %cst_31 : f32 to vector<1x1xf32>
      %68 = arith.mulf %67, %59 : vector<1x1xf32>
      %cst_32 = arith.constant 3.000000e-01 : f32
      %69 = vector.broadcast %cst_32 : f32 to vector<1x1xf32>
      %70 = arith.mulf %69, %66 : vector<1x1xf32>
      %71 = arith.addf %68, %70 : vector<1x1xf32>
      %72 = tpu.iota {dimensions = array<i32: 1>} : vector<1x128xi32>
      %c0_i32_33 = arith.constant 0 : i32
      %73 = vector.broadcast %c0_i32_33 : i32 to vector<1x128xi32>
      %74 = arith.cmpi eq, %72, %73 : vector<1x128xi32>
      %c1_i32 = arith.constant 1 : i32
      %75 = vector.broadcast %c1_i32 : i32 to vector<1x128xi32>
      %76 = arith.cmpi eq, %72, %75 : vector<1x128xi32>
      %77 = vector.shape_cast %66 : vector<1x1xf32> to vector<1x1xf32>
      %78 = vector.broadcast %77 : vector<1x1xf32> to vector<1x128xf32>
      %79 = vector.shape_cast %71 : vector<1x1xf32> to vector<1x1xf32>
      %80 = vector.broadcast %79 : vector<1x1xf32> to vector<1x128xf32>
      %81 = arith.select %76, %78, %80 : vector<1x128xi1>, vector<1x128xf32>
      %82 = vector.shape_cast %59 : vector<1x1xf32> to vector<1x1xf32>
      %83 = vector.broadcast %82 : vector<1x1xf32> to vector<1x128xf32>
      %84 = arith.select %74, %83, %81 : vector<1x128xi1>, vector<1x128xf32>
      %c0_34 = arith.constant 0 : index
      %c0_35 = arith.constant 0 : index
      %c0_36 = arith.constant 0 : index
      %85 = vector.load %arg6[%c0_34, %c0_35, %c0_36] : memref<1x1x128xf32, #tpu.memory_space<vmem>>, vector<1x1x128xf32>
      %86 = vector.shape_cast %85 : vector<1x1x128xf32> to vector<1x128xf32>
      %87 = vector.shape_cast %84 : vector<1x128xf32> to vector<1x1x128xf32>
      tpu.vector_store %arg6[%c0_34, %c0_35, %c0_36], %87 {strides = array<i32>} : memref<1x1x128xf32, #tpu.memory_space<vmem>>, vector<1x1x128xf32>,
    } else {
    }
    return
  }
  func.func @transform_0(%arg0: i32, %arg1: i32) -> i32 {
    %c0_i32 = arith.constant 0 : i32
    %c0_i32_0 = arith.constant 0 : i32
    return %c0_i32 : i32
  }
  func.func @transform_1(%arg0: i32, %arg1: i32) -> (i32, i32, i32) {
    %c0_i32 = arith.constant 0 : i32
    %c0_i32_0 = arith.constant 0 : i32
    return %arg0, %c0_i32, %arg1 : i32, i32, i32
  }
  func.func @transform_2(%arg0: i32, %arg1: i32) -> (i32, i32, i32) {
    %c0_i32 = arith.constant 0 : i32
    %c0_i32_0 = arith.constant 0 : i32
    return %arg0, %c0_i32, %arg1 : i32, i32, i32
  }
  func.func @transform_3(%arg0: i32, %arg1: i32) -> (i32, i32, i32) {
    %c0_i32 = arith.constant 0 : i32
    %c0_i32_0 = arith.constant 0 : i32
    return %arg0, %c0_i32, %arg1 : i32, i32, i32
  }
  func.func @transform_4(%arg0: i32, %arg1: i32) -> (i32, i32, i32) {
    %c0_i32 = arith.constant 0 : i32
    %c0_i32_0 = arith.constant 0 : i32
    %c0_i32_1 = arith.constant 0 : i32
    return %arg0, %c0_i32, %c0_i32_0 : i32, i32, i32
  }
}

</mosaic_0001>

<llo_original>
// kernel: tpu_custom_call.1
$region0: #{tpu_custom_call.1}
  #allocation0 [shape = 'u32[]', space=smem, size = 0x4, offset = 0x4, fixed_abs, tag = 'smem constant byte address 0x4 - core index']
  #allocation1 [shape = 'u32[144,128]{1,0:T(1,128)}', space=vmem, size = 0x12000, scoped, tag = 'internal scratch']
  #allocation2 [shape = 'f32[4,1]{1,0:T(4,128)}', space=vmem, size = 0x800, scoped, tag = 'scratch operand']
  #allocation3 [shape = 'f32[4,1]{1,0:T(4,128)}', space=vmem, size = 0x800, scoped, tag = 'scratch operand']
  %s0 = inlined_call_operand.hbm [shape: f32[2], index: 0, kind: input, shape index: {}]
  %s1 = inlined_call_operand.hbm [shape: f32[2,4,1024], index: 1, kind: input, shape index: {}]
  %s2 = inlined_call_operand.hbm [shape: f32[2,4,1024], index: 2, kind: input, shape index: {}]
  %s3 = inlined_call_operand.hbm [shape: f32[2,1,1024], index: 3, kind: input, shape index: {}]
  %s4 = inlined_call_operand.hbm [shape: f32[2,1,128], index: 4, kind: output, shape index: {}]
  %s5 = sld [smem:[#allocation0]]
  $region73: #{tpu_custom_call.1} parent=0
    _
  %s7 = ssub.s32 1, %s5
  %s8 = scalar_select 0, %s7, %s5
  $region1: #{tpu_custom_call.1} parent=0
    #allocation4 [shape = 'u8[512]{0}', space=smem, size = 0x200, scoped, tag = 'input window, operand 0, single buffered']
    #allocation5 [shape = 's32[2]{0}', space=sflag, size = 0x8, scoped, tag = 'scoped memory for tpu_custom_call.1']
    #allocation6 [shape = 's32[2]{0}', space=sflag, size = 0x8, scoped, tag = 'scoped memory for tpu_custom_call.1']
    #allocation7 [shape = 's32[2]{0}', space=sflag, size = 0x8, scoped, tag = 'scoped memory for tpu_custom_call.1']
    #allocation8 [shape = 'u8[32768]{0}', space=vmem, size = 0x8000, scoped, tag = 'input window, operand 1']
    #allocation9 [shape = 'u8[32768]{0}', space=vmem, size = 0x8000, scoped, tag = 'input window, operand 2']
    #allocation10 [shape = 's32[2]{0}', space=sflag, size = 0x8, scoped, tag = 'scoped memory for tpu_custom_call.1']
    #allocation11 [shape = 'u8[8192]{0}', space=vmem, size = 0x2000, scoped, tag = 'input window, operand 3']
    #allocation12 [shape = 'u8[1024]{0}', space=vmem, size = 0x400, scoped, tag = 'output window, operand 0']
    %9 = vsyncpa [#allocation7], 0
    %10 = vsyncpa [#allocation5], 0
    %s11 = scalar_lea.sflag [#allocation5], 1
    %12 = vsyncpa %s11, 0
    %13 = vsyncpa [#allocation10], 0
    %s14 = scalar_lea.sflag [#allocation10], 1
    %15 = vsyncpa %s14, 0
    %16 = vsyncpa [#allocation6], 0
    %s17 = scalar_lea.sflag [#allocation6], 1
    %18 = vsyncpa %s17, 0
    loop: start=0, step=1, limit=4
    $region2: #{tpu_custom_call.1} parent=1 // loop_pre_header
      _
    $region3: #{tpu_custom_call.1} parent=1 // loop_header
      %s20 = sphi 0, %s24
      %p21 = scmp.ge.s32.totalorder %s20, 4
      %s27 = sphi 0, %s39
      %s28 = sphi 0, %s35
      %s29 = sphi 0, %s27
      %s30 = sphi 0, %s28
      %s31 = sphi 0, %s29
      %s32 = sphi 0, %s30
      %s40 = sphi 0, %s40
      %s42 = sphi 0, %s40
      %s43 = sphi 0, %s42
      %s57 = sphi 0, %s43
      %s65 = sphi 0, %s67
      %s68 = sphi 0, %s65
      %s69 = sphi 0, %s68
      %s85 = sphi 0, %s69
      %s93 = sphi 0, %s95
      %s96 = sphi 0, %s93
      %s97 = sphi 0, %s96
      %s113 = sphi 0, %s97
      %s121 = sphi 0, %s123
      %s124 = sphi 0, %s121
      %s125 = sphi 0, %s124
      %s141 = sphi 0, %s125
      %s147 = sphi 0, %s149
      %s150 = sphi 0, %s147
      %s151 = sphi 0, %s150
      %s167 = sphi 0, %s151
    $region4: #{tpu_custom_call.1} parent=1 // loop_header_branch
      %23 = sbr.rel (%p21) target = $region8
    $region5: #{tpu_custom_call.1} parent=1 // loop_body
      %s25 = ssub.s32 %s20, 1
      %s26 = ssub.s32 %s20, 2
      %s33 = sadd.s32 1, %s28
      %p34 = scmp.ge.s32.totalorder %s33, 1
      %s35 = scalar_select %p34, 0, %s33
      %s36 = sadd.s32 1, %s27
      %s37 = scalar_select %p34, %s36, %s27
      %p38 = scmp.ge.s32.totalorder %s37, 2
      %s39 = scalar_select %p38, 0, %s37
      %s41 = sadd.s32 %s40, 1
      %p44 = scmp.eq.s32.totalorder %s20, 1
      %p45 = scmp.ne.s32.totalorder %s40, %s42
      %p46 = scmp.eq.s32.totalorder %s20, 0
      %p47 = por %p45, %p46
      %p48 = scmp.ne.s32.totalorder %s40, %s42
      %p49 = scmp.eq.s32.totalorder %s25, 1
      %p50 = por %p48, %p49
      %p51 = scmp.ne.s32.totalorder %s42, %s43
      %p52 = scmp.eq.s32.totalorder %s25, 0
      %p53 = por %p51, %p52
      %p54 = scmp.ne.s32.totalorder %s42, %s43
      %p55 = scmp.eq.s32.totalorder %s26, 1
      %p56 = por %p54, %p55
      %p58 = scmp.ne.s32.totalorder %s43, %s57
      %p59 = scmp.eq.s32.totalorder %s26, 0
      %p60 = por %p58, %p59
      %s61 = ssub.s32 %s27, %s39
      %s62 = ssub.s32 %s28, %s35
      %s63 = sor.u32 %s61, %s62
      %p64 = scmp.eq.s32.totalorder %s63, 0
      %s66 = sadd.s32 %s65, 1
      %s67 = scalar_select %p64, %s65, %s66
      %p70 = pneg %p64
      %p71 = scmp.eq.s32.totalorder %s20, 1
      %p72 = por %p70, %p71
      %p73 = scmp.ne.s32.totalorder %s65, %s68
      %p74 = scmp.eq.s32.totalorder %s20, 0
      %p75 = por %p73, %p74
      %p76 = scmp.ne.s32.totalorder %s65, %s68
      %p77 = scmp.eq.s32.totalorder %s25, 1
      %p78 = por %p76, %p77
      %p79 = scmp.ne.s32.totalorder %s68, %s69
      %p80 = scmp.eq.s32.totalorder %s25, 0
      %p81 = por %p79, %p80
      %p82 = scmp.ne.s32.totalorder %s68, %s69
      %p83 = scmp.eq.s32.totalorder %s26, 1
      %p84 = por %p82, %p83
      %p86 = scmp.ne.s32.totalorder %s69, %s85
      %p87 = scmp.eq.s32.totalorder %s26, 0
      %p88 = por %p86, %p87
      %s89 = ssub.s32 %s27, %s39
      %s90 = ssub.s32 %s28, %s35
      %s91 = sor.u32 %s89, %s90
      %p92 = scmp.eq.s32.totalorder %s91, 0
      %s94 = sadd.s32 %s93, 1
      %s95 = scalar_select %p92, %s93, %s94
      %p98 = pneg %p92
      %p99 = scmp.eq.s32.totalorder %s20, 1
      %p100 = por %p98, %p99
      %p101 = scmp.ne.s32.totalorder %s93, %s96
      %p102 = scmp.eq.s32.totalorder %s20, 0
      %p103 = por %p101, %p102
      %p104 = scmp.ne.s32.totalorder %s93, %s96
      %p105 = scmp.eq.s32.totalorder %s25, 1
      %p106 = por %p104, %p105
      %p107 = scmp.ne.s32.totalorder %s96, %s97
      %p108 = scmp.eq.s32.totalorder %s25, 0
      %p109 = por %p107, %p108
      %p110 = scmp.ne.s32.totalorder %s96, %s97
      %p111 = scmp.eq.s32.totalorder %s26, 1
      %p112 = por %p110, %p111
      %p114 = scmp.ne.s32.totalorder %s97, %s113
      %p115 = scmp.eq.s32.totalorder %s26, 0
      %p116 = por %p114, %p115
      %s117 = ssub.s32 %s27, %s39
      %s118 = ssub.s32 %s28, %s35
      %s119 = sor.u32 %s117, %s118
      %p120 = scmp.eq.s32.totalorder %s119, 0
      %s122 = sadd.s32 %s121, 1
      %s123 = scalar_select %p120, %s121, %s122
      %p126 = pneg %p120
      %p127 = scmp.eq.s32.totalorder %s20, 1
      %p128 = por %p126, %p127
      %p129 = scmp.ne.s32.totalorder %s121, %s124
      %p130 = scmp.eq.s32.totalorder %s20, 0
      %p131 = por %p129, %p130
      %p132 = scmp.ne.s32.totalorder %s121, %s124
      %p133 = scmp.eq.s32.totalorder %s25, 1
      %p134 = por %p132, %p133
      %p135 = scmp.ne.s32.totalorder %s124, %s125
      %p136 = scmp.eq.s32.totalorder %s25, 0
      %p137 = por %p135, %p136
      %p138 = scmp.ne.s32.totalorder %s124, %s125
      %p139 = scmp.eq.s32.totalorder %s26, 1
      %p140 = por %p138, %p139
      %p142 = scmp.ne.s32.totalorder %s125, %s141
      %p143 = scmp.eq.s32.totalorder %s26, 0
      %p144 = por %p142, %p143
      %s145 = ssub.s32 %s27, %s39
      %p146 = scmp.eq.s32.totalorder %s145, 0
      %s148 = sadd.s32 %s147, 1
      %s149 = scalar_select %p146, %s147, %s148
      %p152 = pneg %p146
      %p153 = scmp.eq.s32.totalorder %s20, 1
      %p154 = por %p152, %p153
      %p155 = scmp.ne.s32.totalorder %s147, %s150
      %p156 = scmp.eq.s32.totalorder %s20, 0
      %p157 = por %p155, %p156
      %p158 = scmp.ne.s32.totalorder %s147, %s150
      %p159 = scmp.eq.s32.totalorder %s25, 1
      %p160 = por %p158, %p159
      %p161 = scmp.ne.s32.totalorder %s150, %s151
      %p162 = scmp.eq.s32.totalorder %s25, 0
      %p163 = por %p161, %p162
      %p164 = scmp.ne.s32.totalorder %s150, %s151
      %p165 = scmp.eq.s32.totalorder %s26, 1
      %p166 = por %p164, %p165
      %p168 = scmp.ne.s32.totalorder %s151, %s167
      %p169 = scmp.eq.s32.totalorder %s26, 0
      %p170 = por %p168, %p169
      %p171 = scmp.le.s32.totalorder 1, %s20
      %p172 = scmp.lt.s32.totalorder %s20, 3
      %p173 = pnand %p171, %p172
      %p174 = pneg %p173
      // Predicated region
      $region9: #{tpu_custom_call.1} parent=5 // pred_check
        _
      $region10: #{tpu_custom_call.1} parent=5 // pred_check_branch
        %176 = sbr.rel (%p173) target = $region12
      $region11: #{tpu_custom_call.1} parent=5 // pred_region
        %s177 = ssub.s32 %s20, 1
        // Predicated region
        $region13: #{tpu_custom_call.1} parent=11 // pred_check
          %p178 = pneg %p53
        $region14: #{tpu_custom_call.1} parent=11 // pred_check_branch
          %180 = sbr.rel (%p178) target = $region16
        $region15: #{tpu_custom_call.1} parent=11 // pred_region
          %s182 = ssub.s32 16, 16
          %183 = vsyncadd [#allocation7], %s182
          %186 = dma.hbm_to_smem %s0, 16, [#allocation4], [#allocation7]
        $region16: #{tpu_custom_call.1} parent=11 // pred_fallthru
          _
      $region12: #{tpu_custom_call.1} parent=5 // pred_fallthru
        _
      %p187 = scmp.lt.s32.totalorder %s20, 2
      // Predicated region
      $region17: #{tpu_custom_call.1} parent=5 // pred_check
        %p188 = pneg %p187
      $region18: #{tpu_custom_call.1} parent=5 // pred_check_branch
        %190 = sbr.rel (%p188) target = $region20
      $region19: #{tpu_custom_call.1} parent=5 // pred_region
        // Predicated region
        $region21: #{tpu_custom_call.1} parent=19 // pred_check
          %p191 = pneg %p75
        $region22: #{tpu_custom_call.1} parent=19 // pred_check_branch
          %193 = sbr.rel (%p191) target = $region24
        $region23: #{tpu_custom_call.1} parent=19 // pred_region
          %s194 = sand.u32 %s65, 1
          %s195 = scalar_lea.sflag [#allocation5], %s194
          %s196 = sand.u32 %s65, 1
          %s197 = smul.addr %s196, 32
          %s198 = scalar_lea.vmem [#allocation8], %s197
          %s199 = smul.u32 8, %s28
          %s201 = ssub.s32 512, 512
          %202 = vsyncadd %s195, %s201
          %s203 = smul.addr %s27, 8
          %s204 = sadd.s32 %s199, %s203
          %s205 = smul.addr %s204, 64
          %s206 = scalar_lea.hbm %s1, %s205
          %s208 = sshll.u32 %s198, 4
          %s209 = int_to_ptr.vmem [resolvable:$true] %s208
          %211 = dma.hbm_to_vmem [thread:$0]  %s206, 512, %s209, %s195
        $region24: #{tpu_custom_call.1} parent=19 // pred_fallthru
          _
        // Predicated region
        $region25: #{tpu_custom_call.1} parent=19 // pred_check
          %p212 = pneg %p103
        $region26: #{tpu_custom_call.1} parent=19 // pred_check_branch
          %214 = sbr.rel (%p212) target = $region28
        $region27: #{tpu_custom_call.1} parent=19 // pred_region
          %s215 = sand.u32 %s20, 1
          %s216 = scalar_lea.sflag [#allocation10], %s215
          %s217 = sand.u32 %s93, 1
          %s218 = smul.addr %s217, 32
          %s219 = scalar_lea.vmem [#allocation9], %s218
          %s220 = smul.u32 8, %s28
          %s222 = ssub.s32 512, 512
          %223 = vsyncadd %s216, %s222
          %s224 = smul.addr %s27, 8
          %s225 = sadd.s32 %s220, %s224
          %s226 = smul.addr %s225, 64
          %s227 = scalar_lea.hbm %s2, %s226
          %s229 = sshll.u32 %s219, 4
          %s230 = int_to_ptr.vmem [resolvable:$true] %s229
          %232 = dma.hbm_to_vmem [thread:$0]  %s227, 512, %s230, %s216
        $region28: #{tpu_custom_call.1} parent=19 // pred_fallthru
          _
        // Predicated region
        $region29: #{tpu_custom_call.1} parent=19 // pred_check
          %p233 = pneg %p131
        $region30: #{tpu_custom_call.1} parent=19 // pred_check_branch
          %235 = sbr.rel (%p233) target = $region32
        $region31: #{tpu_custom_call.1} parent=19 // pred_region
          %s236 = sand.u32 %s20, 1
          %s237 = scalar_lea.sflag [#allocation10], %s236
          %s238 = sand.u32 %s121, 1
          %s239 = smul.addr %s238, 8
          %s240 = scalar_lea.vmem [#allocation11], %s239
          %s241 = smul.u32 8, %s28
          %s243 = ssub.s32 128, 128
          %244 = vsyncadd %s237, %s243
          %s245 = smul.addr %s27, 8
          %s246 = sadd.s32 %s241, %s245
          %s247 = smul.addr %s246, 16
          %s248 = scalar_lea.hbm %s3, %s247
          %s250 = sshll.u32 %s240, 4
          %s251 = int_to_ptr.vmem [resolvable:$true] %s250
          %253 = dma.hbm_to_vmem [thread:$0]  %s248, 128, %s251, %s237
        $region32: #{tpu_custom_call.1} parent=19 // pred_fallthru
          _
      $region20: #{tpu_custom_call.1} parent=5 // pred_fallthru
        _
      %p254 = scmp.le.s32.totalorder 1, %s20
      %p255 = scmp.lt.s32.totalorder %s20, 3
      %p256 = pnand %p254, %p255
      %p257 = pneg %p256
      // Predicated region
      $region33: #{tpu_custom_call.1} parent=5 // pred_check
        _
      $region34: #{tpu_custom_call.1} parent=5 // pred_check_branch
        %259 = sbr.rel (%p256) target = $region36
      $region35: #{tpu_custom_call.1} parent=5 // pred_region
        %s260 = ssub.s32 %s20, 1
        // Predicated region
        $region37: #{tpu_custom_call.1} parent=35 // pred_check
          %p261 = pneg %p53
        $region38: #{tpu_custom_call.1} parent=35 // pred_check_branch
          %263 = sbr.rel (%p261) target = $region40
        $region39: #{tpu_custom_call.1} parent=35 // pred_region
          %264 = dma.done [#allocation7], 16
        $region40: #{tpu_custom_call.1} parent=35 // pred_fallthru
          _
        %s265 = sand.u32 %s68, 1
        %s266 = scalar_lea.sflag [#allocation5], %s265
        %s267 = sand.u32 %s68, 1
        %s268 = smul.addr %s267, 32
        %s269 = scalar_lea.vmem [#allocation8], %s268
        // Predicated region
        $region41: #{tpu_custom_call.1} parent=35 // pred_check
          %p270 = pneg %p81
        $region42: #{tpu_custom_call.1} parent=35 // pred_check_branch
          %272 = sbr.rel (%p270) target = $region44
        $region43: #{tpu_custom_call.1} parent=35 // pred_region
          %273 = dma.done %s266, 512
        $region44: #{tpu_custom_call.1} parent=35 // pred_fallthru
          _
        %s274 = sand.u32 %s25, 1
        %s275 = scalar_lea.sflag [#allocation10], %s274
        %s276 = sand.u32 %s96, 1
        %s277 = smul.addr %s276, 32
        %s278 = scalar_lea.vmem [#allocation9], %s277
        // Predicated region
        $region45: #{tpu_custom_call.1} parent=35 // pred_check
          %p279 = pneg %p109
        $region46: #{tpu_custom_call.1} parent=35 // pred_check_branch
          %281 = sbr.rel (%p279) target = $region48
        $region47: #{tpu_custom_call.1} parent=35 // pred_region
          %282 = dma.done %s275, 512
        $region48: #{tpu_custom_call.1} parent=35 // pred_fallthru
          _
        %s283 = sand.u32 %s25, 1
        %s284 = scalar_lea.sflag [#allocation10], %s283
        %s285 = sand.u32 %s124, 1
        %s286 = smul.addr %s285, 8
        %s287 = scalar_lea.vmem [#allocation11], %s286
        // Predicated region
        $region49: #{tpu_custom_call.1} parent=35 // pred_check
          %p288 = pneg %p137
        $region50: #{tpu_custom_call.1} parent=35 // pred_check_branch
          %290 = sbr.rel (%p288) target = $region52
        $region51: #{tpu_custom_call.1} parent=35 // pred_region
          %291 = dma.done %s284, 128
        $region52: #{tpu_custom_call.1} parent=35 // pred_fallthru
          _
        %292 = sfence
        %p293 = pneg %p53
        %p294 = pneg %p50
        %s295 = sand.u32 %s68, 1
        %s296 = scalar_lea.sflag [#allocation5], %s295
        %s297 = sand.u32 %s68, 1
        %s298 = smul.addr %s297, 32
        %s299 = scalar_lea.vmem [#allocation8], %s298
        %p300 = pneg %p81
        %p301 = pneg %p78
        %s302 = sand.u32 %s25, 1
        %s303 = scalar_lea.sflag [#allocation10], %s302
        %s304 = sand.u32 %s96, 1
        %s305 = smul.addr %s304, 32
        %s306 = scalar_lea.vmem [#allocation9], %s305
        %p307 = pneg %p109
        %p308 = pneg %p106
        %s309 = sand.u32 %s25, 1
        %s310 = scalar_lea.sflag [#allocation10], %s309
        %s311 = sand.u32 %s124, 1
        %s312 = smul.addr %s311, 8
        %s313 = scalar_lea.vmem [#allocation11], %s312
        %p314 = pneg %p137
        %p315 = pneg %p134
        %p316 = pneg %p163
        %p317 = pneg %p160
        %s318 = sand.u32 %s150, 1
        %s319 = scalar_lea.sflag [#allocation6], %s318
        %s320 = sand.u32 %s150, 1
        %s321 = scalar_lea.vmem [#allocation12], %s320
        %s322 = smul.u32 8, %s30
        %s323 = smul.u32 8, %s30
        %s324 = smul.u32 8, %s30
        %p325 = scmp.eq.s32.totalorder %s30, 0
        // Predicated region
        $region53: #{tpu_custom_call.1} parent=35 // pred_check
          %p326 = pneg %p325
        $region54: #{tpu_custom_call.1} parent=35 // pred_check_branch
          %328 = sbr.rel (%p326) target = $region56
        $region55: #{tpu_custom_call.1} parent=35 // pred_region
          %vm329 = vcmask 3072
          %330 = vst.msk [vmem:[#allocation2] sm:$0xf] %vm329, 0.0
          %331 = vst.msk [vmem:[#allocation3] sm:$0xf] %vm329, 0.0
        $region56: #{tpu_custom_call.1} parent=35 // pred_fallthru
          _
        %v332 = vld [vmem:[%s269] sm:$0xff]
        %v333 = vld [vmem:[%s269 + $0x8] sm:$0xff]
        %v334 = vld [vmem:[%s269 + $0x10] sm:$0xff]
        %v335 = vld [vmem:[%s269 + $0x18] sm:$0xff]
        %v336 = vld [vmem:[%s278] sm:$0xff]
        %v337 = vld [vmem:[%s278 + $0x8] sm:$0xff]
        %v338 = vld [vmem:[%s278 + $0x10] sm:$0xff]
        %v339 = vld [vmem:[%s278 + $0x18] sm:$0xff]
        %v340 = vld [vmem:[%s287] sm:$0xff]
        %v343 = vunpack.c.l.s4 286326784
        %v344 = vunpack.c.0.s8 %v343
        %v345 = vlaneseq
        %v346 = vshrl.u32 %v345, 7
        %v347 = vsub.s32 %v344, %v346
        %v348 = vrot.slane %v340, %v347
        %v350 = vunpack.c.l.s4 858989090
        %v351 = vunpack.c.0.s8 %v350
        %v352 = vlaneseq
        %v353 = vshrl.u32 %v352, 7
        %v354 = vsub.s32 %v351, %v353
        %v355 = vrot.slane %v340, %v354
        %v357 = vunpack.c.l.s4 1431651396
        %v358 = vunpack.c.0.s8 %v357
        %v359 = vlaneseq
        %v360 = vshrl.u32 %v359, 7
        %v361 = vsub.s32 %v358, %v360
        %v362 = vrot.slane %v340, %v361
        %v364 = vunpack.c.l.s4 2004313702
        %v365 = vunpack.c.0.s8 %v364
        %v366 = vlaneseq
        %v367 = vshrl.u32 %v366, 7
        %v368 = vsub.s32 %v365, %v367
        %v369 = vrot.slane %v340, %v368
        %v374 = vmul.f32 %v332, %v348
        %v375 = vmul.f32 %v333, %v355
        %v376 = vmul.f32 %v334, %v362
        %v377 = vmul.f32 %v335, %v369
        %s378 = sld [smem:[#allocation4 + %s29]]
        %v379 = vstv %s378
        %vm380 = vcmp.ge.f32.partialorder %v374, %v379
        %vm381 = vcmp.ge.f32.partialorder %v375, %v379
        %vm382 = vcmp.ge.f32.partialorder %v376, %v379
        %vm383 = vcmp.ge.f32.partialorder %v377, %v379
        %v384 = vsel %vm380, 1, 0
        %v385 = vsel %vm381, 1, 0
        %v386 = vsel %vm382, 1, 0
        %v387 = vsel %vm383, 1, 0
        %v388 = vcvt.s32.f32 %v384
        %v389 = vcvt.s32.f32 %v385
        %v390 = vcvt.s32.f32 %v386
        %v391 = vcvt.s32.f32 %v387
        %v397 = vunpack.c.l.s4 1966171168
        %v398 = vunpack.c.0.s8 %v397
        %v399 = vlaneseq
        %v400 = vshrl.u32 %v399, 7
        %v401 = vsub.s32 %v398, %v400
        %v402 = vrot.slane %v388, %v401
        %v404 = vunpack.c.l.s4 1966171168
        %v405 = vunpack.c.0.s8 %v404
        %v406 = vlaneseq
        %v407 = vshrl.u32 %v406, 7
        %v408 = vsub.s32 %v405, %v407
        %v409 = vrot.slane %v389, %v408
        %v411 = vunpack.c.l.s4 1966171168
        %v412 = vunpack.c.0.s8 %v411
        %v413 = vlaneseq
        %v414 = vshrl.u32 %v413, 7
        %v415 = vsub.s32 %v412, %v414
        %v416 = vrot.slane %v390, %v415
        %v418 = vunpack.c.l.s4 1966171168
        %v419 = vunpack.c.0.s8 %v418
        %v420 = vlaneseq
        %v421 = vshrl.u32 %v420, 7
        %v422 = vsub.s32 %v419, %v421
        %v423 = vrot.slane %v391, %v422
        %v424 = vcombine.high %v402, %v409
        %v425 = vcombine.high %v416, %v423
        %v427 = vunpack.c.l.s4 1966171168
        %v428 = vunpack.c.0.s8 %v427
        %v429 = vlaneseq
        %v430 = vshrl.u32 %v429, 7
        %v431 = vsub.s32 %v428, %v430
        %v432 = vrot.slane %v424, %v431
        %v434 = vunpack.c.l.s4 1966171168
        %v435 = vunpack.c.0.s8 %v434
        %v436 = vlaneseq
        %v437 = vshrl.u32 %v436, 7
        %v438 = vsub.s32 %v435, %v437
        %v439 = vrot.slane %v425, %v438
        %v440 = vcombine.high %v432, %v439
        %v442 = vmul.f32 %v340, %v440
        %vm443 = vcmp.ge.f32.partialorder %v374, 0.5
        %vm444 = vcmp.ge.f32.partialorder %v375, 0.5
        %vm445 = vcmp.ge.f32.partialorder %v376, 0.5
        %vm446 = vcmp.ge.f32.partialorder %v377, 0.5
        %v447 = vsel %vm443, 1, 0
        %v448 = vsel %vm444, 1, 0
        %v449 = vsel %vm445, 1, 0
        %v450 = vsel %vm446, 1, 0
        %v451 = vcvt.s32.f32 %v447
        %v452 = vcvt.s32.f32 %v448
        %v453 = vcvt.s32.f32 %v449
        %v454 = vcvt.s32.f32 %v450
        %v455 = vlaneseq
        %v456 = vshrl.u32 %v455, 7
        %vm457 = vcmp.eq.s32.totalorder %v456, 3
        %v458 = vsel %vm457, 1, 0
        %vm459 = vcmp.eq.s32.totalorder %v458, 1
        %v461 = vlaneseq
        %v462 = vshrl.u32 %v461, 7
        %v463 = vsub.s32 0, %v462
        %v464 = vrot.slane %v442, %v463
        %v465 = vlaneseq
        %v466 = vshrl.u32 %v465, 7
        %v467 = vsub.s32 1, %v466
        %v468 = vrot.slane %v442, %v467
        %v469 = vlaneseq
        %v470 = vshrl.u32 %v469, 7
        %v471 = vsub.s32 2, %v470
        %v472 = vrot.slane %v442, %v471
        %v473 = vlaneseq
        %v474 = vshrl.u32 %v473, 7
        %v475 = vsub.s32 3, %v474
        %v476 = vrot.slane %v442, %v475
        %v477 = vlaneseq
        %v478 = vshrl.u32 %v477, 7
        %v479 = vsub.s32 4, %v478
        %v480 = vrot.slane %v442, %v479
        %v481 = vlaneseq
        %v482 = vshrl.u32 %v481, 7
        %v483 = vsub.s32 5, %v482
        %v484 = vrot.slane %v442, %v483
        %v485 = vlaneseq
        %v486 = vshrl.u32 %v485, 7
        %v487 = vsub.s32 6, %v486
        %v488 = vrot.slane %v442, %v487
        %v489 = vlaneseq
        %v490 = vshrl.u32 %v489, 7
        %v491 = vsub.s32 7, %v490
        %v492 = vrot.slane %v442, %v491
        %v505 = vlaneseq
        %v506 = vshrl.u32 %v505, 7
        %v507 = vsub.s32 3, %v506
        %v508 = vrot.slane %v451, %v507
        %v509 = vlaneseq
        %v510 = vshrl.u32 %v509, 7
        %v511 = vsub.s32 7, %v510
        %v512 = vrot.slane %v451, %v511
        %v513 = vlaneseq
        %v514 = vshrl.u32 %v513, 7
        %v515 = vsub.s32 3, %v514
        %v516 = vrot.slane %v452, %v515
        %v517 = vlaneseq
        %v518 = vshrl.u32 %v517, 7
        %v519 = vsub.s32 7, %v518
        %v520 = vrot.slane %v452, %v519
        %v521 = vlaneseq
        %v522 = vshrl.u32 %v521, 7
        %v523 = vsub.s32 3, %v522
        %v524 = vrot.slane %v453, %v523
        %v525 = vlaneseq
        %v526 = vshrl.u32 %v525, 7
        %v527 = vsub.s32 7, %v526
        %v528 = vrot.slane %v453, %v527
        %v529 = vlaneseq
        %v530 = vshrl.u32 %v529, 7
        %v531 = vsub.s32 3, %v530
        %v532 = vrot.slane %v454, %v531
        %v533 = vlaneseq
        %v534 = vshrl.u32 %v533, 7
        %v535 = vsub.s32 7, %v534
        %v536 = vrot.slane %v454, %v535
        %v545 = vlaneseq
        %v546 = vshrl.u32 %v545, 7
        %v547 = vsub.s32 3, %v546
        %v548 = vrot.slane %v508, %v547
        %v549 = vlaneseq
        %v550 = vshrl.u32 %v549, 7
        %v551 = vsub.s32 3, %v550
        %v552 = vrot.slane %v512, %v551
        %v553 = vlaneseq
        %v554 = vshrl.u32 %v553, 7
        %v555 = vsub.s32 3, %v554
        %v556 = vrot.slane %v516, %v555
        %v557 = vlaneseq
        %v558 = vshrl.u32 %v557, 7
        %v559 = vsub.s32 3, %v558
        %v560 = vrot.slane %v520, %v559
        %v561 = vlaneseq
        %v562 = vshrl.u32 %v561, 7
        %v563 = vsub.s32 3, %v562
        %v564 = vrot.slane %v524, %v563
        %v565 = vlaneseq
        %v566 = vshrl.u32 %v565, 7
        %v567 = vsub.s32 3, %v566
        %v568 = vrot.slane %v528, %v567
        %v569 = vlaneseq
        %v570 = vshrl.u32 %v569, 7
        %v571 = vsub.s32 3, %v570
        %v572 = vrot.slane %v532, %v571
        %v573 = vlaneseq
        %v574 = vshrl.u32 %v573, 7
        %v575 = vsub.s32 3, %v574
        %v576 = vrot.slane %v536, %v575
        %v577 = vsel %vm459, %v464, %v548
        %v578 = vsel %vm459, %v468, %v552
        %v579 = vsel %vm459, %v472, %v556
        %v580 = vsel %vm459, %v476, %v560
        %v581 = vsel %vm459, %v480, %v564
        %v582 = vsel %vm459, %v484, %v568
        %v583 = vsel %vm459, %v488, %v572
        %v584 = vsel %vm459, %v492, %v576
        %v585 = vld [vmem:[#allocation2] sm:$0xf]
        %v586 = vmul.f32 %v332, %v336
        %v587 = vmul.f32 %v333, %v337
        %v588 = vmul.f32 %v334, %v338
        %v589 = vmul.f32 %v335, %v339
        %v598 = vcombine.low %v577, %v578
        %v599 = vcombine.low %v579, %v580
        %v600 = vcombine.low %v581, %v582
        %v601 = vcombine.low %v583, %v584
        %v606 = vmul.f32 %v586, %v598
        %v607 = vmul.f32 %v587, %v599
        %v608 = vmul.f32 %v588, %v600
        %v609 = vmul.f32 %v589, %v601
        %v614 = vcombine.high %v606, %v606
        %v615 = vcombine.high %v607, %v607
        %v616 = vcombine.high %v608, %v608
        %v617 = vcombine.high %v609, %v609
        %vm622 = vcmask 1043456
        %v623 = vsel %vm622, %v606, 0.0
        %v624 = vsel %vm622, %v614, 0.0
        %v625 = vadd.f32 %v623, %v624
        %v626 = vsel %vm622, %v607, 0.0
        %v627 = vadd.f32 %v625, %v626
        %v628 = vsel %vm622, %v615, 0.0
        %v629 = vadd.f32 %v627, %v628
        %v630 = vsel %vm622, %v608, 0.0
        %v631 = vadd.f32 %v629, %v630
        %v632 = vsel %vm622, %v616, 0.0
        %v633 = vadd.f32 %v631, %v632
        %v634 = vsel %vm622, %v609, 0.0
        %v635 = vadd.f32 %v633, %v634
        %v636 = vsel %vm622, %v617, 0.0
        %v637 = vadd.f32 %v635, %v636
        %638 = vadd.xlane.f32.xlu0 %v637
        %v639 = vpop.xlane.xlu0 %638
        %v640 = vadd.f32 %v585, %v639
        %vm641 = vcmask 3072
        %642 = vst.msk [vmem:[#allocation2] sm:$0xf] %vm641, %v640
        %v643 = vld [vmem:[#allocation3] sm:$0xf]
        %v644 = vmul.f32 %v332, %v332
        %v645 = vmul.f32 %v333, %v333
        %v646 = vmul.f32 %v334, %v334
        %v647 = vmul.f32 %v335, %v335
        %v648 = vadd.f32 %v644, %v336
        %v649 = vadd.f32 %v645, %v337
        %v650 = vadd.f32 %v646, %v338
        %v651 = vadd.f32 %v647, %v339
        %v652 = vmul.f32 %v648, %v598
        %v653 = vmul.f32 %v649, %v599
        %v654 = vmul.f32 %v650, %v600
        %v655 = vmul.f32 %v651, %v601
        %v660 = vcombine.high %v652, %v652
        %v661 = vcombine.high %v653, %v653
        %v662 = vcombine.high %v654, %v654
        %v663 = vcombine.high %v655, %v655
        %v668 = vsel %vm622, %v652, 0.0
        %v669 = vsel %vm622, %v660, 0.0
        %v670 = vadd.f32 %v668, %v669
        %v671 = vsel %vm622, %v653, 0.0
        %v672 = vadd.f32 %v670, %v671
        %v673 = vsel %vm622, %v661, 0.0
        %v674 = vadd.f32 %v672, %v673
        %v675 = vsel %vm622, %v654, 0.0
        %v676 = vadd.f32 %v674, %v675
        %v677 = vsel %vm622, %v662, 0.0
        %v678 = vadd.f32 %v676, %v677
        %v679 = vsel %vm622, %v655, 0.0
        %v680 = vadd.f32 %v678, %v679
        %v681 = vsel %vm622, %v663, 0.0
        %v682 = vadd.f32 %v680, %v681
        %683 = vadd.xlane.f32.xlu0 %v682
        %v684 = vpop.xlane.xlu0 %683
        %v685 = vadd.f32 %v643, %v684
        %686 = vst.msk [vmem:[#allocation3] sm:$0xf] %vm641, %v685
        // Predicated region
        $region57: #{tpu_custom_call.1} parent=35 // pred_check
          %p687 = pneg %p325
        $region58: #{tpu_custom_call.1} parent=35 // pred_check_branch
          %689 = sbr.rel (%p687) target = $region60
        $region59: #{tpu_custom_call.1} parent=35 // pred_region
          %v690 = vld [vmem:[#allocation2] sm:$0xf]
          %v691 = vmul.f32 %v690, 2.0
          %v692 = vld [vmem:[#allocation3] sm:$0xf]
          %v693 = vadd.f32 %v692, 1e-06
          %v694 = vrcp.pop %v693
          %v695 = vmul.f32 %v691, %v694
          %v696 = vsub.f32 1.0, %v695
          %vm697 = vcmask 2048
          %v698 = vsel %vm697, %v695, 0.0
          %v699 = vrot.slane %v698, 4
          %v700 = vadd.f32 %v698, %v699
          %v701 = vrot.slane %v700, 2
          %v702 = vadd.f32 %v700, %v701
          %v703 = vrot.slane %v702, 1
          %v704 = vadd.f32 %v702, %v703
          %v705 = vrcp.pop 3.0
          %v706 = vmul.f32 %v704, %v705
          %v707 = vsub.f32 1.0, %v706
          %v708 = vmul.f32 %v696, 0.7
          %v709 = vmul.f32 %v707, 0.3
          %v710 = vadd.f32 %v708, %v709
          %v711 = vlaneseq
          %v712 = vand.u32 %v711, 127
          %vm713 = vcmp.eq.s32.totalorder %v712, 0
          %vm714 = vcmp.eq.s32.totalorder %v712, 1
          %716 = vset.pattern.permute.xlu0 0
          %717 = vperm.xlu0 %716, %v707
          %v718 = vpop.permute.xlu0 %717
          %721 = vset.pattern.permute.xlu0 0
          %722 = vperm.xlu0 %721, %v710
          %v723 = vpop.permute.xlu0 %722
          %v725 = vsel %vm714, %v718, %v723
          %727 = vset.pattern.permute.xlu0 0
          %728 = vperm.xlu0 %727, %v696
          %v729 = vpop.permute.xlu0 %728
          %v731 = vsel %vm713, %v729, %v725
          %732 = vst [vmem:[%s321 - $0x3] sm:$0x8] %v731
        $region60: #{tpu_custom_call.1} parent=35 // pred_fallthru
          _
        %s733 = sand.u32 %s150, 1
        %s734 = scalar_lea.sflag [#allocation6], %s733
        %s735 = sand.u32 %s150, 1
        %s736 = scalar_lea.vmem [#allocation12], %s735
        // Predicated region
        $region61: #{tpu_custom_call.1} parent=35 // pred_check
          %p737 = pneg %p160
        $region62: #{tpu_custom_call.1} parent=35 // pred_check_branch
          %739 = sbr.rel (%p737) target = $region64
        $region63: #{tpu_custom_call.1} parent=35 // pred_region
          %s741 = ssub.s32 16, 16
          %742 = vsyncadd %s734, %s741
          %s743 = smul.addr %s29, 16
          %s744 = scalar_lea.hbm %s4, %s743
          %s746 = sshll.u32 %s736, 4
          %s747 = int_to_ptr.vmem [resolvable:$true] %s746
          %749 = dma.vmem_to_hbm [thread:$0]  %s747, 16, %s744, %s734
        $region64: #{tpu_custom_call.1} parent=35 // pred_fallthru
          _
      $region36: #{tpu_custom_call.1} parent=5 // pred_fallthru
        _
      %p750 = scmp.le.s32.totalorder 2, %s20
      // Predicated region
      $region65: #{tpu_custom_call.1} parent=5 // pred_check
        %p751 = pneg %p750
      $region66: #{tpu_custom_call.1} parent=5 // pred_check_branch
        %753 = sbr.rel (%p751) target = $region68
      $region67: #{tpu_custom_call.1} parent=5 // pred_region
        %s754 = ssub.s32 %s20, 2
        // Predicated region
        $region69: #{tpu_custom_call.1} parent=67 // pred_check
          %p755 = pneg %p166
        $region70: #{tpu_custom_call.1} parent=67 // pred_check_branch
          %757 = sbr.rel (%p755) target = $region72
        $region71: #{tpu_custom_call.1} parent=67 // pred_region
          %s758 = sand.u32 %s151, 1
          %s759 = scalar_lea.sflag [#allocation6], %s758
          %s760 = sand.u32 %s151, 1
          %s761 = scalar_lea.vmem [#allocation12], %s760
          %762 = dma.done %s759, 16
        $region72: #{tpu_custom_call.1} parent=67 // pred_fallthru
          _
      $region68: #{tpu_custom_call.1} parent=5 // pred_fallthru
        _
    $region6: #{tpu_custom_call.1} parent=1 // loop_footer
      %s24 = sadd.s32 1, %s20
    $region7: #{tpu_custom_call.1} parent=1 // loop_footer_branch
      %19 = sbr.rel target = $region3
    $region8: #{tpu_custom_call.1} parent=1 // loop_exit
      _
    %763 = vsyncpa [#allocation5], 1
    %s764 = scalar_lea.sflag [#allocation5], 1
    %765 = vsyncpa %s764, 1
    %766 = vsyncpa [#allocation10], 1
    %s767 = scalar_lea.sflag [#allocation10], 1
    %768 = vsyncpa %s767, 1
    %769 = vsyncpa [#allocation6], 1
    %s770 = scalar_lea.sflag [#allocation6], 1
    %771 = vsyncpa %s770, 1
    %772 = vsyncpa [#allocation7], 1
    %s773 = scalar_lea.sflag [#allocation7], 1
    %774 = vsyncpa %s773, 1

</llo_original>
